<compile_context>
chip_gen: v5e
topology: v5e:2x2
jax: 0.10.0
libtpu: 0.0.40
codegen_flags: <defaults>
</compile_context>

<pallas_src>
import jax
import jax.numpy as jnp
from jax.experimental import pallas as pl
from jax.experimental.pallas import tpu as pltpu


def discriminator_kernel(
    state_ref,    # (S,  TB)  bf16
    action_ref,   # (A,  TB)  bf16
    wet_ref,      # (E,  A)   bf16   (We^T)
    be_ref,       # (E,  1)   f32
    w1st_ref,     # (H1, S)   bf16   (W1[state part]^T)
    w1at_ref,     # (H1, E)   bf16   (W1[embed part]^T)
    b1_ref,       # (H1, 1)   f32
    w2t_ref,      # (H2, H1)  bf16   (W2^T)
    b2_ref,       # (H2, 1)   f32
    w3_ref,       # (H2, 1)   f32
    b3_ref,       # (1,  1)   f32
    out_ref,      # (1,  TB)  f32
):
    s = state_ref[...]
    a = action_ref[...]

    # Action embedder: Linear + ReLU  -> (E, TB) f32
    emb = jnp.dot(wet_ref[...], a, preferred_element_type=jnp.float32) + be_ref[...]
    emb = jnp.maximum(emb, 0.0)

    # Head layer 1 on cat([state, action_emb]) as a split matmul -> (H1, TB)
    h1 = (jnp.dot(w1st_ref[...], s, preferred_element_type=jnp.float32)
          + jnp.dot(w1at_ref[...], emb.astype(jnp.bfloat16),
                    preferred_element_type=jnp.float32)
          + b1_ref[...])
    h1 = jnp.maximum(h1, 0.0)

    # Head layer 2: Linear + ReLU -> (H2, TB)
    h2 = (jnp.dot(w2t_ref[...], h1.astype(jnp.bfloat16),
                  preferred_element_type=jnp.float32)
          + b2_ref[...])
    h2 = jnp.maximum(h2, 0.0)

    # Output layer (H2 -> 1) on the VPU/XLU: multiply + sublane reduce -> (1, TB)
    out = jnp.sum(h2 * w3_ref[...], axis=0, keepdims=True) + b3_ref[...]
    out_ref[...] = out.astype(out_ref.dtype)


def _round_up(x, m):
    return ((x + m - 1) // m) * m


def discriminator_forward(state, action, params, *, tb=1024):
    """state: (B, S) f32, action: (B, A) f32  ->  logits (B, 1) f32."""
    B, S = state.shape
    A = action.shape[1]
    E = params["We"].shape[1]
    H1 = params["W1"].shape[1]
    H2 = params["W2"].shape[1]

    tb = _round_up(tb, 128)
    TB = min(tb, _round_up(B, 128))   # lane-aligned batch tile
    Bp = _round_up(B, TB)             # padded batch (TB divides Bp)
    grid = (Bp // TB,)

    # Batch-last, bf16-streamed activations (pad + transpose + cast fuse in XLA).
    st = jnp.pad(state, ((0, Bp - B), (0, 0))).T.astype(jnp.bfloat16)    # (S, Bp)
    at = jnp.pad(action, ((0, Bp - B), (0, 0))).T.astype(jnp.bfloat16)   # (A, Bp)

    # Kernel-layout weights: transposed, bf16 for MXU operands; biases f32 (H, 1).
    wet = params["We"].T.astype(jnp.bfloat16)                 # (E, A)
    be = params["be"].reshape(E, 1).astype(jnp.float32)
    w1st = params["W1"][:S].T.astype(jnp.bfloat16)            # (H1, S)
    w1at = params["W1"][S:].T.astype(jnp.bfloat16)            # (H1, E)
    b1 = params["b1"].reshape(H1, 1).astype(jnp.float32)
    w2t = params["W2"].T.astype(jnp.bfloat16)                 # (H2, H1)
    b2 = params["b2"].reshape(H2, 1).astype(jnp.float32)
    w3 = params["W3"].reshape(H2, 1).astype(jnp.float32)      # elementwise path: f32
    b3 = params["b3"].reshape(1, 1).astype(jnp.float32)

    def stream_spec(nrows):
        # batch-tiled operand: advance along the lane (batch) axis per grid step
        return pl.BlockSpec((nrows, TB), lambda b: (0, b))

    def resident_spec(shape):
        # constant index_map -> block stays VMEM-resident, never re-DMA'd
        return pl.BlockSpec(shape, lambda b: (0, 0))

    in_specs = [
        stream_spec(S),             # state_t
        stream_spec(A),             # action_t
        resident_spec((E, A)),      # We^T
        resident_spec((E, 1)),      # be
        resident_spec((H1, S)),     # W1s^T
        resident_spec((H1, E)),     # W1a^T
        resident_spec((H1, 1)),     # b1
        resident_spec((H2, H1)),    # W2^T
        resident_spec((H2, 1)),     # b2
        resident_spec((H2, 1)),     # w3
        resident_spec((1, 1)),      # b3
    ]
    out_spec = pl.BlockSpec((1, TB), lambda b: (0, b))

    flops = 2 * Bp * (A * E + S * H1 + E * H1 + H1 * H2 + H2)
    bytes_accessed = (
        st.size * 2 + at.size * 2 + Bp * 4
        + (wet.size + w1st.size + w1at.size + w2t.size) * 2
        + (be.size + b1.size + b2.size + w3.size + b3.size) * 4
    )

    out_t = pl.pallas_call(
        discriminator_kernel,
        grid=grid,
        in_specs=in_specs,
        out_specs=out_spec,
        out_shape=jax.ShapeDtypeStruct((1, Bp), jnp.float32),
        compiler_params=pltpu.CompilerParams(
            dimension_semantics=("parallel",)),
        cost_estimate=pl.CostEstimate(
            flops=flops, transcendentals=0, bytes_accessed=bytes_accessed),
    )(st, at, wet, be, w1st, w1at, b1, w2t, b2, w3, b3)

    return out_t[0, :B].reshape(B, 1)


def init_params(key, state_size, action_size, embed_size, h1, h2):
    """PyTorch-style f32 parameters (weights stored (in_features, out_features))."""
    ks = jax.random.split(key, 8)
    scale = 0.1
    return {
        # action embedder: Linear(action_size -> embed_size)
        "We": scale * jax.random.normal(ks[0], (action_size, embed_size), jnp.float32),
        "be": scale * jax.random.normal(ks[1], (embed_size,), jnp.float32),
        # head layer 1: Linear(state_size + embed_size -> h1)
        "W1": scale * jax.random.normal(ks[2], (state_size + embed_size, h1), jnp.float32),
        "b1": scale * jax.random.normal(ks[3], (h1,), jnp.float32),
        # head layer 2: Linear(h1 -> h2)
        "W2": scale * jax.random.normal(ks[4], (h1, h2), jnp.float32),
        "b2": scale * jax.random.normal(ks[5], (h2,), jnp.float32),
        # head output: Linear(h2 -> 1)
        "W3": scale * jax.random.normal(ks[6], (h2, 1), jnp.float32),
        "b3": scale * jax.random.normal(ks[7], (1,), jnp.float32),
    }


def reference_forward(state, action, params):
    """Pure-JAX f32 reference matching the PyTorch Discriminator semantics."""
    emb = jnp.maximum(action @ params["We"] + params["be"], 0.0)
    x = jnp.concatenate([state, emb], axis=-1)
    h1 = jnp.maximum(x @ params["W1"] + params["b1"], 0.0)
    h2 = jnp.maximum(h1 @ params["W2"] + params["b2"], 0.0)
    return h2 @ params["W3"] + params["b3"]


if __name__ == "__main__":
    batch = 2
    state_size = 16
    action_size = 4
    embed_size = 8
    h1, h2 = 32, 32

    key = jax.random.PRNGKey(0)
    k_state, k_action, k_params = jax.random.split(key, 3)

    state = jax.random.normal(k_state, (batch, state_size), jnp.float32)
    action = jax.random.normal(k_action, (batch, action_size), jnp.float32)
    params = init_params(k_params, state_size, action_size, embed_size, h1, h2)

    out = discriminator_forward(state, action, params)
    out = jax.block_until_ready(out)

    ref = reference_forward(state, action, params)
    assert out.shape == (batch, 1)
    # bf16 MXU inputs with f32 accumulation -> compare against f32 reference
    # with a tolerance that covers bf16 rounding of the small intermediates.
    assert jnp.allclose(out, ref, atol=5e-2, rtol=5e-2), (out, ref)

    print("KERNEL_OK")
</pallas_src>

<mosaic_0001>
module attributes {stable_mosaic.version = 11 : i64} {
  func.func @discriminator_kernel(%arg0: i32, %arg1: memref<16x128xbf16, #tpu.memory_space<vmem>>, %arg2: memref<4x128xbf16, #tpu.memory_space<vmem>>, %arg3: memref<8x4xbf16, #tpu.memory_space<vmem>>, %arg4: memref<8x1xf32, #tpu.memory_space<vmem>>, %arg5: memref<32x16xbf16, #tpu.memory_space<vmem>>, %arg6: memref<32x8xbf16, #tpu.memory_space<vmem>>, %arg7: memref<32x1xf32, #tpu.memory_space<vmem>>, %arg8: memref<32x32xbf16, #tpu.memory_space<vmem>>, %arg9: memref<32x1xf32, #tpu.memory_space<vmem>>, %arg10: memref<32x1xf32, #tpu.memory_space<vmem>>, %arg11: memref<1x1xf32, #tpu.memory_space<vmem>>, %arg12: memref<1x128xf32, #tpu.memory_space<vmem>>) attributes {dimension_semantics = [#tpu.dimension_semantics<parallel>], iteration_bounds = array<i64: 1>, scalar_prefetch = 0 : i64, scratch_operands = 0 : i64, tpu.core_type = #tpu.core_type<tc>, window_params = [{transform_indices = @transform_0, window_bounds = array<i64: 16, 128>}, {transform_indices = @transform_1, window_bounds = array<i64: 4, 128>}, {pipeline_mode = #tpu.pipeline_mode<synchronous>, transform_indices = @transform_2, window_bounds = array<i64: 8, 4>}, {pipeline_mode = #tpu.pipeline_mode<synchronous>, transform_indices = @transform_3, window_bounds = array<i64: 8, 1>}, {pipeline_mode = #tpu.pipeline_mode<synchronous>, transform_indices = @transform_4, window_bounds = array<i64: 32, 16>}, {pipeline_mode = #tpu.pipeline_mode<synchronous>, transform_indices = @transform_5, window_bounds = array<i64: 32, 8>}, {pipeline_mode = #tpu.pipeline_mode<synchronous>, transform_indices = @transform_6, window_bounds = array<i64: 32, 1>}, {pipeline_mode = #tpu.pipeline_mode<synchronous>, transform_indices = @transform_7, window_bounds = array<i64: 32, 32>}, {pipeline_mode = #tpu.pipeline_mode<synchronous>, transform_indices = @transform_8, window_bounds = array<i64: 32, 1>}, {pipeline_mode = #tpu.pipeline_mode<synchronous>, transform_indices = @transform_9, window_bounds = array<i64: 32, 1>}, {pipeline_mode = #tpu.pipeline_mode<synchronous>, transform_indices = @transform_10, window_bounds = array<i64: 1, 1>}, {transform_indices = @transform_11, window_bounds = array<i64: 1, 128>}]} {
    %c0 = arith.constant 0 : index
    %c0_0 = arith.constant 0 : index
    %0 = vector.load %arg1[%c0, %c0_0] : memref<16x128xbf16, #tpu.memory_space<vmem>>, vector<16x128xbf16>
    %c0_1 = arith.constant 0 : index
    %c0_2 = arith.constant 0 : index
    %1 = vector.load %arg2[%c0_1, %c0_2] : memref<4x128xbf16, #tpu.memory_space<vmem>>, vector<4x128xbf16>
    %c0_3 = arith.constant 0 : index
    %c0_4 = arith.constant 0 : index
    %2 = vector.load %arg3[%c0_3, %c0_4] : memref<8x4xbf16, #tpu.memory_space<vmem>>, vector<8x4xbf16>
    %cst = arith.constant dense<0.000000e+00> : vector<8x128xf32>
    %3 = tpu.matmul %2, %1, %cst {dimension_numbers = #tpu.dot_dimension_numbers<[1], [0], [0], [1], [0, 0, 1, 1], [], []>} : vector<8x4xbf16>, vector<4x128xbf16>, vector<8x128xf32> -> vector<8x128xf32>
    %c0_5 = arith.constant 0 : index
    %c0_6 = arith.constant 0 : index
    %4 = vector.load %arg4[%c0_5, %c0_6] : memref<8x1xf32, #tpu.memory_space<vmem>>, vector<8x1xf32>
    %5 = vector.broadcast %4 : vector<8x1xf32> to vector<8x128xf32>
    %6 = arith.addf %3, %5 : vector<8x128xf32>
    %cst_7 = arith.constant 0.000000e+00 : f32
    %7 = vector.broadcast %cst_7 : f32 to vector<8x128xf32>
    %8 = arith.maximumf %6, %7 : vector<8x128xf32>
    %c0_8 = arith.constant 0 : index
    %c0_9 = arith.constant 0 : index
    %9 = vector.load %arg5[%c0_8, %c0_9] : memref<32x16xbf16, #tpu.memory_space<vmem>>, vector<32x16xbf16>
    %cst_10 = arith.constant dense<0.000000e+00> : vector<32x128xf32>
    %10 = tpu.matmul %9, %0, %cst_10 {dimension_numbers = #tpu.dot_dimension_numbers<[1], [0], [0], [1], [0, 0, 1, 1], [], []>} : vector<32x16xbf16>, vector<16x128xbf16>, vector<32x128xf32> -> vector<32x128xf32>
    %c0_11 = arith.constant 0 : index
    %c0_12 = arith.constant 0 : index
    %11 = vector.load %arg6[%c0_11, %c0_12] : memref<32x8xbf16, #tpu.memory_space<vmem>>, vector<32x8xbf16>
    %12 = arith.truncf %8 : vector<8x128xf32> to vector<8x128xbf16>
    %cst_13 = arith.constant dense<0.000000e+00> : vector<32x128xf32>
    %13 = tpu.matmul %11, %12, %cst_13 {dimension_numbers = #tpu.dot_dimension_numbers<[1], [0], [0], [1], [0, 0, 1, 1], [], []>} : vector<32x8xbf16>, vector<8x128xbf16>, vector<32x128xf32> -> vector<32x128xf32>
    %14 = arith.addf %10, %13 : vector<32x128xf32>
    %c0_14 = arith.constant 0 : index
    %c0_15 = arith.constant 0 : index
    %15 = vector.load %arg7[%c0_14, %c0_15] : memref<32x1xf32, #tpu.memory_space<vmem>>, vector<32x1xf32>
    %16 = vector.broadcast %15 : vector<32x1xf32> to vector<32x128xf32>
    %17 = arith.addf %14, %16 : vector<32x128xf32>
    %cst_16 = arith.constant 0.000000e+00 : f32
    %18 = vector.broadcast %cst_16 : f32 to vector<32x128xf32>
    %19 = arith.maximumf %17, %18 : vector<32x128xf32>
    %c0_17 = arith.constant 0 : index
    %c0_18 = arith.constant 0 : index
    %20 = vector.load %arg8[%c0_17, %c0_18] : memref<32x32xbf16, #tpu.memory_space<vmem>>, vector<32x32xbf16>
    %21 = arith.truncf %19 : vector<32x128xf32> to vector<32x128xbf16>
    %cst_19 = arith.constant dense<0.000000e+00> : vector<32x128xf32>
    %22 = tpu.matmul %20, %21, %cst_19 {dimension_numbers = #tpu.dot_dimension_numbers<[1], [0], [0], [1], [0, 0, 1, 1], [], []>} : vector<32x32xbf16>, vector<32x128xbf16>, vector<32x128xf32> -> vector<32x128xf32>
    %c0_20 = arith.constant 0 : index
    %c0_21 = arith.constant 0 : index
    %23 = vector.load %arg9[%c0_20, %c0_21] : memref<32x1xf32, #tpu.memory_space<vmem>>, vector<32x1xf32>
    %24 = vector.broadcast %23 : vector<32x1xf32> to vector<32x128xf32>
    %25 = arith.addf %22, %24 : vector<32x128xf32>
    %cst_22 = arith.constant 0.000000e+00 : f32
    %26 = vector.broadcast %cst_22 : f32 to vector<32x128xf32>
    %27 = arith.maximumf %25, %26 : vector<32x128xf32>
    %c0_23 = arith.constant 0 : index
    %c0_24 = arith.constant 0 : index
    %28 = vector.load %arg10[%c0_23, %c0_24] : memref<32x1xf32, #tpu.memory_space<vmem>>, vector<32x1xf32>
    %29 = vector.broadcast %28 : vector<32x1xf32> to vector<32x128xf32>
    %30 = arith.mulf %27, %29 : vector<32x128xf32>
    %cst_25 = arith.constant dense<0.000000e+00> : vector<128xf32>
    %31 = vector.multi_reduction <add>, %30, %cst_25 [0] : vector<32x128xf32> to vector<128xf32>
    %32 = vector.shape_cast %31 : vector<128xf32> to vector<1x128xf32>
    %c0_26 = arith.constant 0 : index
    %c0_27 = arith.constant 0 : index
    %33 = vector.load %arg11[%c0_26, %c0_27] : memref<1x1xf32, #tpu.memory_space<vmem>>, vector<1x1xf32>
    %34 = vector.broadcast %33 : vector<1x1xf32> to vector<1x128xf32>
    %35 = arith.addf %32, %34 : vector<1x128xf32>
    %c0_28 = arith.constant 0 : index
    %c0_29 = arith.constant 0 : index
    %36 = vector.load %arg12[%c0_28, %c0_29] : memref<1x128xf32, #tpu.memory_space<vmem>>, vector<1x128xf32>
    tpu.vector_store %arg12[%c0_28, %c0_29], %35 {strides = array<i32>} : memref<1x128xf32, #tpu.memory_space<vmem>>, vector<1x128xf32>,
    return
  }
  func.func @transform_0(%arg0: i32) -> (i32, i32) {
    %c0_i32 = arith.constant 0 : i32
    %c0_i32_0 = arith.constant 0 : i32
    return %c0_i32, %arg0 : i32, i32
  }
  func.func @transform_1(%arg0: i32) -> (i32, i32) {
    %c0_i32 = arith.constant 0 : i32
    %c0_i32_0 = arith.constant 0 : i32
    return %c0_i32, %arg0 : i32, i32
  }
  func.func @transform_2(%arg0: i32) -> (i32, i32) {
    %c0_i32 = arith.constant 0 : i32
    %c0_i32_0 = arith.constant 0 : i32
    %c0_i32_1 = arith.constant 0 : i32
    return %c0_i32, %c0_i32_0 : i32, i32
  }
  func.func @transform_3(%arg0: i32) -> (i32, i32) {
    %c0_i32 = arith.constant 0 : i32
    %c0_i32_0 = arith.constant 0 : i32
    %c0_i32_1 = arith.constant 0 : i32
    return %c0_i32, %c0_i32_0 : i32, i32
  }
  func.func @transform_4(%arg0: i32) -> (i32, i32) {
    %c0_i32 = arith.constant 0 : i32
    %c0_i32_0 = arith.constant 0 : i32
    %c0_i32_1 = arith.constant 0 : i32
    return %c0_i32, %c0_i32_0 : i32, i32
  }
  func.func @transform_5(%arg0: i32) -> (i32, i32) {
    %c0_i32 = arith.constant 0 : i32
    %c0_i32_0 = arith.constant 0 : i32
    %c0_i32_1 = arith.constant 0 : i32
    return %c0_i32, %c0_i32_0 : i32, i32
  }
  func.func @transform_6(%arg0: i32) -> (i32, i32) {
    %c0_i32 = arith.constant 0 : i32
    %c0_i32_0 = arith.constant 0 : i32
    %c0_i32_1 = arith.constant 0 : i32
    return %c0_i32, %c0_i32_0 : i32, i32
  }
  func.func @transform_7(%arg0: i32) -> (i32, i32) {
    %c0_i32 = arith.constant 0 : i32
    %c0_i32_0 = arith.constant 0 : i32
    %c0_i32_1 = arith.constant 0 : i32
    return %c0_i32, %c0_i32_0 : i32, i32
  }
  func.func @transform_8(%arg0: i32) -> (i32, i32) {
    %c0_i32 = arith.constant 0 : i32
    %c0_i32_0 = arith.constant 0 : i32
    %c0_i32_1 = arith.constant 0 : i32
    return %c0_i32, %c0_i32_0 : i32, i32
  }
  func.func @transform_9(%arg0: i32) -> (i32, i32) {
    %c0_i32 = arith.constant 0 : i32
    %c0_i32_0 = arith.constant 0 : i32
    %c0_i32_1 = arith.constant 0 : i32
    return %c0_i32, %c0_i32_0 : i32, i32
  }
  func.func @transform_10(%arg0: i32) -> (i32, i32) {
    %c0_i32 = arith.constant 0 : i32
    %c0_i32_0 = arith.constant 0 : i32
    %c0_i32_1 = arith.constant 0 : i32
    return %c0_i32, %c0_i32_0 : i32, i32
  }
  func.func @transform_11(%arg0: i32) -> (i32, i32) {
    %c0_i32 = arith.constant 0 : i32
    %c0_i32_0 = arith.constant 0 : i32
    return %c0_i32, %arg0 : i32, i32
  }
}

</mosaic_0001>

<llo_original>
// kernel: tpu_custom_call.1
$region0: #{tpu_custom_call.1}
  #allocation0 [shape = 'u32[]', space=smem, size = 0x4, offset = 0x4, fixed_abs, tag = 'smem constant byte address 0x4 - core index']
  #allocation1 [shape = 'u32[72,128]{1,0:T(1,128)}', space=vmem, size = 0x9000, scoped, tag = 'internal scratch']
  #allocation2 [shape = 'f32[1,1]{1,0:T(1,128)S(1)}', space=vmem, size = 0x200, scoped, tag = 'scoped memory for tpu_custom_call.1']
  %s0 = inlined_call_operand.vmem [shape: bf16[16,128], index: 0, kind: input, shape index: {}]
  %s1 = inlined_call_operand.vmem [shape: bf16[4,128], index: 1, kind: input, shape index: {}]
  %s2 = inlined_call_operand.vmem [shape: bf16[8,4], index: 2, kind: input, shape index: {}]
  %s3 = inlined_call_operand.vmem [shape: f32[8,1], index: 3, kind: input, shape index: {}]
  %s4 = inlined_call_operand.vmem [shape: bf16[32,16], index: 4, kind: input, shape index: {}]
  %s5 = inlined_call_operand.vmem [shape: bf16[32,8], index: 5, kind: input, shape index: {}]
  %s6 = inlined_call_operand.vmem [shape: f32[32,1], index: 6, kind: input, shape index: {}]
  %s7 = inlined_call_operand.vmem [shape: bf16[32,32], index: 7, kind: input, shape index: {}]
  %s8 = inlined_call_operand.vmem [shape: f32[32,1], index: 8, kind: input, shape index: {}]
  %s9 = inlined_call_operand.vmem [shape: f32[32,1], index: 9, kind: input, shape index: {}]
  %s10 = inlined_call_operand.<no memory space> [shape: f32[1,1], index: 10, kind: input, shape index: {}]
  %s11 = inlined_call_operand.hbm [shape: f32[1,128], index: 11, kind: output, shape index: {}]
  %s12 = sld [smem:[#allocation0]]
  $region54: #{tpu_custom_call.1} parent=0
    _
  %s14 = ssub.s32 1, %s12
  %s15 = scalar_select 0, %s14, %s12
  %v16 = vstv %s10
  %17 = vst [vmem:[#allocation2] sm:$0x1] %v16
  $region1: #{tpu_custom_call.1} parent=0
    #allocation3 [shape = 'u8[512]{0}', space=vmem, size = 0x400, scoped, tag = 'output window, operand 0, single buffered']
    #allocation4 [shape = 's32[1]{0}', space=sflag, size = 0x4, scoped, tag = 'scoped memory for tpu_custom_call.1']
    %18 = vsyncpa [#allocation4], 0
    // Predicated region
    $region2: #{tpu_custom_call.1} parent=1 // pred_check
      _
    $region3: #{tpu_custom_call.1} parent=1 // pred_check_branch
      %20 = sbr.rel (0) target = $region5
    $region4: #{tpu_custom_call.1} parent=1 // pred_region
      _
    $region5: #{tpu_custom_call.1} parent=1 // pred_fallthru
      _
    // Predicated region
    $region6: #{tpu_custom_call.1} parent=1 // pred_check
      _
    $region7: #{tpu_custom_call.1} parent=1 // pred_check_branch
      %22 = sbr.rel (0) target = $region9
    $region8: #{tpu_custom_call.1} parent=1 // pred_region
      _
    $region9: #{tpu_custom_call.1} parent=1 // pred_fallthru
      _
    // Predicated region
    $region10: #{tpu_custom_call.1} parent=1 // pred_check
      _
    $region11: #{tpu_custom_call.1} parent=1 // pred_check_branch
      %24 = sbr.rel (0) target = $region13
    $region12: #{tpu_custom_call.1} parent=1 // pred_region
      _
    $region13: #{tpu_custom_call.1} parent=1 // pred_fallthru
      _
    // Predicated region
    $region14: #{tpu_custom_call.1} parent=1 // pred_check
      _
    $region15: #{tpu_custom_call.1} parent=1 // pred_check_branch
      %26 = sbr.rel (0) target = $region17
    $region16: #{tpu_custom_call.1} parent=1 // pred_region
      _
    $region17: #{tpu_custom_call.1} parent=1 // pred_fallthru
      _
    // Predicated region
    $region18: #{tpu_custom_call.1} parent=1 // pred_check
      _
    $region19: #{tpu_custom_call.1} parent=1 // pred_check_branch
      %28 = sbr.rel (0) target = $region21
    $region20: #{tpu_custom_call.1} parent=1 // pred_region
      _
    $region21: #{tpu_custom_call.1} parent=1 // pred_fallthru
      _
    // Predicated region
    $region22: #{tpu_custom_call.1} parent=1 // pred_check
      _
    $region23: #{tpu_custom_call.1} parent=1 // pred_check_branch
      %30 = sbr.rel (0) target = $region25
    $region24: #{tpu_custom_call.1} parent=1 // pred_region
      _
    $region25: #{tpu_custom_call.1} parent=1 // pred_fallthru
      _
    // Predicated region
    $region26: #{tpu_custom_call.1} parent=1 // pred_check
      _
    $region27: #{tpu_custom_call.1} parent=1 // pred_check_branch
      %32 = sbr.rel (0) target = $region29
    $region28: #{tpu_custom_call.1} parent=1 // pred_region
      _
    $region29: #{tpu_custom_call.1} parent=1 // pred_fallthru
      _
    // Predicated region
    $region30: #{tpu_custom_call.1} parent=1 // pred_check
      _
    $region31: #{tpu_custom_call.1} parent=1 // pred_check_branch
      %34 = sbr.rel (0) target = $region33
    $region32: #{tpu_custom_call.1} parent=1 // pred_region
      _
    $region33: #{tpu_custom_call.1} parent=1 // pred_fallthru
      _
    // Predicated region
    $region34: #{tpu_custom_call.1} parent=1 // pred_check
      _
    $region35: #{tpu_custom_call.1} parent=1 // pred_check_branch
      %36 = sbr.rel (0) target = $region37
    $region36: #{tpu_custom_call.1} parent=1 // pred_region
      _
    $region37: #{tpu_custom_call.1} parent=1 // pred_fallthru
      _
    // Predicated region
    $region38: #{tpu_custom_call.1} parent=1 // pred_check
      _
    $region39: #{tpu_custom_call.1} parent=1 // pred_check_branch
      %38 = sbr.rel (0) target = $region41
    $region40: #{tpu_custom_call.1} parent=1 // pred_region
      _
    $region41: #{tpu_custom_call.1} parent=1 // pred_fallthru
      _
    // Predicated region
    $region42: #{tpu_custom_call.1} parent=1 // pred_check
      _
    $region43: #{tpu_custom_call.1} parent=1 // pred_check_branch
      %40 = sbr.rel (0) target = $region45
    $region44: #{tpu_custom_call.1} parent=1 // pred_region
      _
    $region45: #{tpu_custom_call.1} parent=1 // pred_fallthru
      _
    %v42 = vld [vmem:[%s0] sm:$0xf]
    %v43 = vld [vmem:[%s0 + $0x4] sm:$0xf]
    %v44 = vld [vmem:[%s1] sm:$0x3]
    %v45 = vld [vmem:[%s2] sm:$0xf]
    %v46 = vld [vmem:[%s3] sm:$0xff]
    %48 = vset.pattern.permute.xlu0 0
    %49 = vperm.xlu0 %48, %v46
    %v50 = vpop.permute.xlu0 %49
    %vm52 = vcmask 31744
    %v54 = vsel %vm52, %v45, 0
    %vm56 = vcmask 1041408
    %v58 = vsel %vm56, %v44, 0
    %60 = vmatpush.bf16.msra.mxu0 0
    %61 = vmatpush.bf16.msra.mxu0 0
    %62 = vmatpush.bf16.msra.mxu0 0
    %63 = vmatpush.bf16.msra.mxu0 0
    %64 = vmatpush.bf16.msra.mxu0 0
    %65 = vmatpush.bf16.msra.mxu0 0
    %66 = vmatpush.bf16.msra.mxu0 0
    %67 = vmatpush.bf16.msra.mxu0 %v58
    %68 = vmatmul.bf16.gmra.mxu0 %v54
    %v69 = vpop.f32.mrf.mxu0
    %v70 = vadd.f32 %v50, %v69
    %v71 = vpop.f32.mrf.mxu0
    %72 = vdwg.mxu0
    %v73 = vmax.f32 %v70, 0.0
    %v74 = vld [vmem:[%s4] sm:$0xf]
    %v75 = vld [vmem:[%s4 + $0x4] sm:$0xf]
    %v76 = vld [vmem:[%s4 + $0x8] sm:$0xf]
    %v77 = vld [vmem:[%s4 + $0xc] sm:$0xf]
    %v78 = vld [vmem:[%s5] sm:$0xf]
    %v79 = vld [vmem:[%s5 + $0x4] sm:$0xf]
    %v80 = vld [vmem:[%s5 + $0x8] sm:$0xf]
    %v81 = vld [vmem:[%s5 + $0xc] sm:$0xf]
    %v82 = vpack.c.bf16 %v73, %v73
    %v87 = vunpack.c.l.b16 %v78
    %v88 = vunpack.c.l.b16 %v79
    %v89 = vunpack.c.l.b16 %v80
    %v90 = vunpack.c.l.b16 %v81
    %v91 = vpack.c.b16 %v88, %v87
    %v92 = vpack.c.b16 %v90, %v89
    %vm93 = vcmask 64512
    %v95 = vsel %vm93, %v91, 0
    %v98 = vsel %vm93, %v92, 0
    %vm100 = vcmask 1043456
    %v102 = vsel %vm100, %v82, 0
    %104 = vmatpush.bf16.msra.mxu0 0
    %105 = vmatpush.bf16.msra.mxu0 0
    %106 = vmatpush.bf16.msra.mxu0 0
    %107 = vmatpush.bf16.msra.mxu0 0
    %108 = vmatpush.bf16.msra.mxu0 0
    %109 = vmatpush.bf16.msra.mxu0 0
    %110 = vmatpush.bf16.msra.mxu0 0
    %111 = vmatpush.bf16.msra.mxu0 %v102
    %112 = vmatmul.bf16.gmra.mxu0 %v95
    %v113 = vpop.f32.mrf.mxu0
    %v114 = vadd.f32 0.0, %v113
    %v115 = vpop.f32.mrf.mxu0
    %v116 = vadd.f32 0.0, %v115
    %117 = vmatmul.bf16.gmra.mxu0 %v98
    %v118 = vpop.f32.mrf.mxu0
    %v119 = vadd.f32 0.0, %v118
    %v120 = vpop.f32.mrf.mxu0
    %v121 = vadd.f32 0.0, %v120
    %122 = vdwg.mxu0
    %v127 = vunpack.c.l.b16 %v74
    %v128 = vunpack.c.l.b16 %v75
    %v129 = vunpack.c.l.b16 %v76
    %v130 = vunpack.c.l.b16 %v77
    %v131 = vpack.c.b16 %v128, %v127
    %v132 = vpack.c.b16 %v130, %v129
    %v135 = vunpack.c.l.b16 %v42
    %v136 = vunpack.c.l.b16 %v43
    %v137 = vpack.c.b16 %v136, %v135
    %vm139 = vcmask 130048
    %v141 = vsel %vm139, %v131, 0
    %v144 = vsel %vm139, %v132, 0
    %146 = vmatpush.bf16.msra.mxu0 0
    %147 = vmatpush.bf16.msra.mxu0 0
    %148 = vmatpush.bf16.msra.mxu0 0
    %149 = vmatpush.bf16.msra.mxu0 0
    %150 = vmatpush.bf16.msra.mxu0 0
    %151 = vmatpush.bf16.msra.mxu0 0
    %152 = vmatpush.bf16.msra.mxu0 0
    %153 = vmatpush.bf16.msra.mxu0 %v137
    %154 = vmatmul.bf16.gmra.mxu0 %v141
    %v155 = vpop.f32.mrf.mxu0
    %v156 = vadd.f32 %v114, %v155
    %v157 = vpop.f32.mrf.mxu0
    %v158 = vadd.f32 %v116, %v157
    %159 = vmatmul.bf16.gmra.mxu0 %v144
    %v160 = vpop.f32.mrf.mxu0
    %v161 = vadd.f32 %v119, %v160
    %v162 = vpop.f32.mrf.mxu0
    %v163 = vadd.f32 %v121, %v162
    %164 = vdwg.mxu0
    %v165 = vld [vmem:[%s6] sm:$0xff]
    %v166 = vld [vmem:[%s6 + $0x8] sm:$0xff]
    %v167 = vld [vmem:[%s6 + $0x10] sm:$0xff]
    %v168 = vld [vmem:[%s6 + $0x18] sm:$0xff]
    %170 = vset.pattern.permute.xlu0 0
    %171 = vperm.xlu0 %170, %v165
    %v172 = vpop.permute.xlu0 %171
    %175 = vset.pattern.permute.xlu0 0
    %176 = vperm.xlu0 %175, %v166
    %v177 = vpop.permute.xlu0 %176
    %180 = vset.pattern.permute.xlu0 0
    %181 = vperm.xlu0 %180, %v167
    %v182 = vpop.permute.xlu0 %181
    %185 = vset.pattern.permute.xlu0 0
    %186 = vperm.xlu0 %185, %v168
    %v187 = vpop.permute.xlu0 %186
    %v189 = vadd.f32 %v156, %v172
    %v190 = vadd.f32 %v158, %v177
    %v191 = vadd.f32 %v161, %v182
    %v192 = vadd.f32 %v163, %v187
    %v193 = vmax.f32 %v189, 0.0
    %v194 = vmax.f32 %v190, 0.0
    %v195 = vmax.f32 %v191, 0.0
    %v196 = vmax.f32 %v192, 0.0
    %v197 = vld [vmem:[%s7] sm:$0xf]
    %v198 = vld [vmem:[%s7 + $0x4] sm:$0xf]
    %v199 = vld [vmem:[%s7 + $0x8] sm:$0xf]
    %v200 = vld [vmem:[%s7 + $0xc] sm:$0xf]
    %v201 = vpack.c.bf16 %v194, %v193
    %v202 = vpack.c.bf16 %v196, %v195
    %v203 = vld [vmem:[%s8] sm:$0xff]
    %v204 = vld [vmem:[%s8 + $0x8] sm:$0xff]
    %v205 = vld [vmem:[%s8 + $0x10] sm:$0xff]
    %v206 = vld [vmem:[%s8 + $0x18] sm:$0xff]
    %208 = vset.pattern.permute.xlu0 0
    %209 = vperm.xlu0 %208, %v203
    %v210 = vpop.permute.xlu0 %209
    %213 = vset.pattern.permute.xlu0 0
    %214 = vperm.xlu0 %213, %v204
    %v215 = vpop.permute.xlu0 %214
    %218 = vset.pattern.permute.xlu0 0
    %219 = vperm.xlu0 %218, %v205
    %v220 = vpop.permute.xlu0 %219
    %223 = vset.pattern.permute.xlu0 0
    %224 = vperm.xlu0 %223, %v206
    %v225 = vpop.permute.xlu0 %224
    %v231 = vunpack.c.l.b16 %v197
    %v232 = vunpack.c.l.b16 %v198
    %v233 = vunpack.c.l.b16 %v199
    %v234 = vunpack.c.l.b16 %v200
    %v235 = vpack.c.b16 %v232, %v231
    %v236 = vpack.c.b16 %v234, %v233
    %vm237 = vcmask 261120
    %v239 = vsel %vm237, %v235, 0
    %v242 = vsel %vm237, %v236, 0
    %244 = vmatpush.bf16.msra.mxu0 0
    %245 = vmatpush.bf16.msra.mxu0 0
    %246 = vmatpush.bf16.msra.mxu0 0
    %247 = vmatpush.bf16.msra.mxu0 0
    %248 = vmatpush.bf16.msra.mxu0 0
    %249 = vmatpush.bf16.msra.mxu0 0
    %250 = vmatpush.bf16.msra.mxu0 %v202
    %251 = vmatpush.bf16.msra.mxu0 %v201
    %252 = vmatmul.bf16.gmra.mxu0 %v239
    %v253 = vpop.f32.mrf.mxu0
    %v254 = vadd.f32 %v210, %v253
    %v255 = vpop.f32.mrf.mxu0
    %v256 = vadd.f32 %v215, %v255
    %257 = vmatmul.bf16.gmra.mxu0 %v242
    %v258 = vpop.f32.mrf.mxu0
    %v259 = vadd.f32 %v220, %v258
    %v260 = vpop.f32.mrf.mxu0
    %v261 = vadd.f32 %v225, %v260
    %262 = vdwg.mxu0
    %v263 = vmax.f32 %v254, 0.0
    %v264 = vmax.f32 %v256, 0.0
    %v265 = vmax.f32 %v259, 0.0
    %v266 = vmax.f32 %v261, 0.0
    %v267 = vld [vmem:[%s9] sm:$0xff]
    %v268 = vld [vmem:[%s9 + $0x8] sm:$0xff]
    %v269 = vld [vmem:[%s9 + $0x10] sm:$0xff]
    %v270 = vld [vmem:[%s9 + $0x18] sm:$0xff]
    %272 = vset.pattern.permute.xlu0 0
    %273 = vperm.xlu0 %272, %v267
    %v274 = vpop.permute.xlu0 %273
    %277 = vset.pattern.permute.xlu0 0
    %278 = vperm.xlu0 %277, %v268
    %v279 = vpop.permute.xlu0 %278
    %282 = vset.pattern.permute.xlu0 0
    %283 = vperm.xlu0 %282, %v269
    %v284 = vpop.permute.xlu0 %283
    %287 = vset.pattern.permute.xlu0 0
    %288 = vperm.xlu0 %287, %v270
    %v289 = vpop.permute.xlu0 %288
    %v291 = vmul.f32 %v263, %v274
    %v292 = vmul.f32 %v264, %v279
    %v293 = vmul.f32 %v265, %v284
    %v294 = vmul.f32 %v266, %v289
    %v295 = vadd.f32 %v291, %v292
    %v296 = vadd.f32 %v295, %v293
    %v297 = vadd.f32 %v296, %v294
    %v298 = vrot.slane %v297, 4
    %v299 = vadd.f32 %v297, %v298
    %v300 = vrot.slane %v299, 2
    %v301 = vadd.f32 %v299, %v300
    %v302 = vrot.slane %v301, 1
    %v303 = vadd.f32 %v301, %v302
    %v304 = vld [vmem:[#allocation2] sm:$0x1]
    %306 = vset.pattern.permute.xlu0 0
    %307 = vperm.xlu0 %306, %v304
    %v308 = vpop.permute.xlu0 %307
    %v310 = vperm.slane %v308, 0
    %v311 = vadd.f32 %v303, %v310
    %312 = vst [vmem:[#allocation3] sm:$0x1] %v311
    // Predicated region
    $region46: #{tpu_custom_call.1} parent=1 // pred_check
      _
    $region47: #{tpu_custom_call.1} parent=1 // pred_check_branch
      %314 = sbr.rel (0) target = $region49
    $region48: #{tpu_custom_call.1} parent=1 // pred_region
      %316 = vsyncadd [#allocation4], 0
      %s318 = sshll.u32 [#allocation3], 4
      %s319 = int_to_ptr.vmem [resolvable:$true] %s318
      %s320 = sshll.u32 %s11, 4
      %s321 = int_to_ptr.hbm [resolvable:$true] %s320
      %323 = dma.vmem_to_hbm [thread:$0]  %s319, 16, %s321, [#allocation4]
    $region49: #{tpu_custom_call.1} parent=1 // pred_fallthru
      _
    // Predicated region
    $region50: #{tpu_custom_call.1} parent=1 // pred_check
      _
    $region51: #{tpu_custom_call.1} parent=1 // pred_check_branch
      %325 = sbr.rel (0) target = $region53
    $region52: #{tpu_custom_call.1} parent=1 // pred_region
      %327 = dma.done [#allocation4], 16
    $region53: #{tpu_custom_call.1} parent=1 // pred_fallthru
      _
    %328 = vsyncpa [#allocation4], 1

</llo_original>
